<compile_context>
chip_gen: v7x
topology: tpu7x:2x2x1
jax: 0.10.0
libtpu: 0.0.40
codegen_flags: <defaults>
</compile_context>

<pallas_src>
import jax
import jax.numpy as jnp
from jax.experimental import pallas as pl
from jax.experimental.pallas import tpu as pltpu

SUBLANE = 8


def _round_up(x, m):
    return ((x + m - 1) // m) * m


def _cdiv(a, b):
    return -(-a // b)


def _vmem_capacity():
    try:
        return int(pltpu.get_tpu_info().vmem_capacity_bytes)
    except Exception:
        return 64 << 20            # assume the smallest (v7x) if the query fails


def _batch_tile(B, row_stream_bytes, resident_bytes, max_tile=2048):
    """Pick a sublane-aligned batch tile TB, padded batch B_pad and a matching
    vmem_limit_bytes.  row_stream_bytes = VMEM bytes needed per batch row for all
    pipelined input/output streams (incl. the 2x double-buffer factor) plus any
    per-row scratch; resident_bytes = weights/biases kept in VMEM across the grid."""
    vmem_cap = _vmem_capacity()
    budget = max(int(vmem_cap * 0.45) - resident_bytes, 512 << 10)
    tb_cap = max(SUBLANE, min(budget // max(row_stream_bytes, 1), max_tile))
    tb_cap = (tb_cap // SUBLANE) * SUBLANE
    B8 = _round_up(max(B, 1), SUBLANE)
    nblocks = _cdiv(B8, tb_cap)
    if nblocks == 1 and B8 >= 1024:
        nblocks = 2                          # give both v7x TensorCores work at large B
    TB = _round_up(_cdiv(B8, nblocks), SUBLANE)
    B_pad = nblocks * TB
    need = resident_bytes + TB * row_stream_bytes + (4 << 20)
    vmem_limit = int(min(max(need, 32 << 20), int(vmem_cap * 0.9)))
    return TB, B_pad, vmem_limit


# --------------------------------------------------------------------------- kernels

def _second_order_kernel_prev(rate_ref,            # SMEM (1, 1) f32 cascade_rate
                              x_ref, prev_ref,     # VMEM (TB, D) bf16
                              w1_ref, b1_ref,      # VMEM (D, D) bf16, (1, D) f32
                              w2_ref, b2_ref,      # VMEM (D, 2) bf16, (1, 2) f32
                              wager_ref,           # VMEM (TB, 2) out
                              comp_ref):           # VMEM (TB, D) out
    rate = rate_ref[0, 0]                          # scalar -> free VPU splat
    h = jnp.dot(x_ref[...], w1_ref[...], preferred_element_type=jnp.float32) + b1_ref[...]
    h = jnp.maximum(h, 0.0)
    # TODO(synk): nn.Dropout(p=0.1) is identity at inference; training-mode mask
    # (pltpu.prng_random_bits + 1/0.9 rescale) intentionally not implemented here.
    comp = rate * h + (1.0 - rate) * prev_ref[...].astype(jnp.float32)   # f32 blend (v5e-safe)
    comp_ref[...] = comp.astype(comp_ref.dtype)
    wager = jnp.dot(comp, w2_ref[...], preferred_element_type=jnp.float32) + b2_ref[...]
    wager_ref[...] = wager.astype(wager_ref.dtype)


def _second_order_kernel_noprev(x_ref,
                                w1_ref, b1_ref, w2_ref, b2_ref,
                                wager_ref, comp_ref):
    h = jnp.dot(x_ref[...], w1_ref[...], preferred_element_type=jnp.float32) + b1_ref[...]
    comp = jnp.maximum(h, 0.0)                     # prev=None -> comparison_out = relu(...)
    comp_ref[...] = comp.astype(comp_ref.dtype)
    wager = jnp.dot(comp, w2_ref[...], preferred_element_type=jnp.float32) + b2_ref[...]
    wager_ref[...] = wager.astype(wager_ref.dtype)


def _cascade_kernel(rates_ref,                     # SMEM (1, 2) f32: [rate@t0, rate]
                    x_ref,                         # VMEM (1, TB, D) bf16
                    prev_ref,                      # VMEM (TB, D) bf16 initial comparison state
                    w1_ref, b1_ref, w2_ref, b2_ref,
                    wager_ref,                     # VMEM (1, TB, 2) out
                    comp_ref,                      # VMEM (1, TB, D) out
                    carry_ref):                    # VMEM (TB, D) f32 scratch: comp carry
    t = pl.program_id(1)

    @pl.when(t == 0)
    def _():
        carry_ref[...] = prev_ref[...].astype(jnp.float32)

    # scalar-indexed rate select (no lane blend); step-0 may use a different rate
    rate = jnp.where(t == 0, rates_ref[0, 0], rates_ref[0, 1])
    h = jnp.dot(x_ref[0], w1_ref[...], preferred_element_type=jnp.float32) + b1_ref[...]
    h = jnp.maximum(h, 0.0)
    comp = rate * h + (1.0 - rate) * carry_ref[...]
    carry_ref[...] = comp
    comp_ref[0] = comp.astype(comp_ref.dtype)
    wager = jnp.dot(comp, w2_ref[...], preferred_element_type=jnp.float32) + b2_ref[...]
    wager_ref[0] = wager.astype(wager_ref.dtype)


# --------------------------------------------------------------------------- wrappers

def prepare_params(params, weight_dtype=jnp.bfloat16):
    """Cast parameters ONCE (reuse across forward calls).  Weights are kept
    pre-transposed (in, out) and in bf16 (halves the W1 HBM stream, native MXU bf16
    rate on all generations); biases stay f32 (tiny, added to the f32 accumulator)."""
    w1_t, b1, w2_t, b2 = params
    D = w1_t.shape[0]
    # TODO(synk): for very large num_linear_units (bf16 W1 no longer fits the VMEM
    # budget, D >~ 4k on v7x) add a K-tiled "arbitrary" grid axis + f32 accumulator
    # instead of keeping W1 fully resident.
    return dict(
        w1=w1_t.astype(weight_dtype),              # (D, D)   x @ W1
        b1=b1.reshape(1, D).astype(jnp.float32),   # (1, D)
        w2=w2_t.astype(weight_dtype),              # (D, 2)   comp @ W2
        b2=b2.reshape(1, 2).astype(jnp.float32),   # (1, 2)
        D=D,
    )


def second_order_forward(comparison_matrix, prev_comparison, cascade_rate, prepared,
                         *, stream_dtype=jnp.bfloat16, out_dtype=jnp.float32):
    """comparison_matrix: [B, D]; prev_comparison: [B, D] or None; cascade_rate:
    python float or traced scalar.  Returns (wager [B, 2], comparison_out [B, D])."""
    w1, b1, w2, b2 = prepared["w1"], prepared["b1"], prepared["w2"], prepared["b2"]
    D = prepared["D"]
    B = comparison_matrix.shape[0]

    in_b = jnp.dtype(stream_dtype).itemsize
    out_b = jnp.dtype(out_dtype).itemsize
    n_in = 2 if prev_comparison is not None else 1
    row_bytes = 2 * (n_in * D * in_b + D * out_b + 2 * out_b)    # 2x: double buffering
    resident = (w1.size * w1.dtype.itemsize + w2.size * w2.dtype.itemsize
                + b1.size * b1.dtype.itemsize + b2.size * b2.dtype.itemsize)
    TB, B_pad, vmem_limit = _batch_tile(B, row_bytes, resident)
    grid = (B_pad // TB,)

    def pad_cast(a):                 # bf16 stream + batch-only padding (no feature pad)
        a = a.astype(stream_dtype)
        if B_pad != B:
            a = jnp.pad(a, ((0, B_pad - B), (0, 0)))
        return a

    x = pad_cast(comparison_matrix)

    act_spec = pl.BlockSpec((TB, D), lambda i: (i, 0))
    w1_spec = pl.BlockSpec((D, D), lambda i: (0, 0))            # resident across grid
    b1_spec = pl.BlockSpec((1, D), lambda i: (0, 0))
    w2_spec = pl.BlockSpec((D, 2), lambda i: (0, 0))
    b2_spec = pl.BlockSpec((1, 2), lambda i: (0, 0))
    out_specs = (pl.BlockSpec((TB, 2), lambda i: (i, 0)),        # real 2-wide wager
                 pl.BlockSpec((TB, D), lambda i: (i, 0)))
    out_shape = (jax.ShapeDtypeStruct((B_pad, 2), out_dtype),
                 jax.ShapeDtypeStruct((B_pad, D), out_dtype))
    cparams = pltpu.CompilerParams(dimension_semantics=("parallel",),
                                   vmem_limit_bytes=vmem_limit)

    if prev_comparison is None:
        wager_pad, comp_pad = pl.pallas_call(
            _second_order_kernel_noprev,
            out_shape=out_shape, grid=grid,
            in_specs=[act_spec, w1_spec, b1_spec, w2_spec, b2_spec],
            out_specs=out_specs, compiler_params=cparams,
        )(x, w1, b1, w2, b2)
    else:
        prev = pad_cast(prev_comparison)
        rate = jnp.asarray(cascade_rate, jnp.float32).reshape(1, 1)
        rate_spec = pl.BlockSpec(memory_space=pltpu.MemorySpace.SMEM)
        wager_pad, comp_pad = pl.pallas_call(
            _second_order_kernel_prev,
            out_shape=out_shape, grid=grid,
            in_specs=[rate_spec, act_spec, act_spec,
                      w1_spec, b1_spec, w2_spec, b2_spec],
            out_specs=out_specs, compiler_params=cparams,
        )(rate, x, prev, w1, b1, w2, b2)

    if B_pad != B:
        wager_pad, comp_pad = wager_pad[:B], comp_pad[:B]
    return wager_pad, comp_pad


def second_order_cascade(x_seq, prev_comparison, cascade_rate, prepared,
                         *, stream_dtype=jnp.bfloat16, out_dtype=jnp.float32,
                         return_all_comps=True):
    """Fused loop: applies the module T times, feeding comparison_out back in as
    prev_comparison (weights + f32 comp carry stay in VMEM across steps).
    x_seq: [T, B, D]. Returns (wagers [T, B, 2], comps [T, B, D] or final [B, D])."""
    w1, b1, w2, b2 = prepared["w1"], prepared["b1"], prepared["w2"], prepared["b2"]
    D = prepared["D"]
    T, B, _ = x_seq.shape

    in_b = jnp.dtype(stream_dtype).itemsize
    out_b = jnp.dtype(out_dtype).itemsize
    row_bytes = 2 * (2 * D * in_b + D * out_b + 2 * out_b) + D * 4   # streams + f32 carry
    resident = (w1.size * w1.dtype.itemsize + w2.size * w2.dtype.itemsize
                + b1.size * b1.dtype.itemsize + b2.size * b2.dtype.itemsize)
    TB, B_pad, vmem_limit = _batch_tile(B, row_bytes, resident)
    grid = (B_pad // TB, T)

    x = x_seq.astype(stream_dtype)
    if B_pad != B:
        x = jnp.pad(x, ((0, 0), (0, B_pad - B), (0, 0)))
    rate = jnp.asarray(cascade_rate, jnp.float32)
    if prev_comparison is None:
        prev = jnp.zeros((B_pad, D), stream_dtype)
        rate0 = jnp.float32(1.0)                 # first step: comp = relu(...)
    else:
        prev = prev_comparison.astype(stream_dtype)
        if B_pad != B:
            prev = jnp.pad(prev, ((0, B_pad - B), (0, 0)))
        rate0 = rate
    rates = jnp.stack([rate0, rate]).reshape(1, 2).astype(jnp.float32)

    n_comp_T = T if return_all_comps else 1
    comp_idx = (lambda b, t: (t, b, 0)) if return_all_comps else (lambda b, t: (0, b, 0))

    wager_pad, comp_pad = pl.pallas_call(
        _cascade_kernel,
        out_shape=(jax.ShapeDtypeStruct((T, B_pad, 2), out_dtype),
                   jax.ShapeDtypeStruct((n_comp_T, B_pad, D), out_dtype)),
        grid=grid,
        in_specs=[pl.BlockSpec(memory_space=pltpu.MemorySpace.SMEM),      # rates (SMEM)
                  pl.BlockSpec((1, TB, D), lambda b, t: (t, b, 0)),       # x_t
                  pl.BlockSpec((TB, D), lambda b, t: (b, 0)),             # initial prev
                  pl.BlockSpec((D, D), lambda b, t: (0, 0)),              # W1 (resident)
                  pl.BlockSpec((1, D), lambda b, t: (0, 0)),              # b1
                  pl.BlockSpec((D, 2), lambda b, t: (0, 0)),              # W2
                  pl.BlockSpec((1, 2), lambda b, t: (0, 0))],             # b2
        out_specs=(pl.BlockSpec((1, TB, 2), lambda b, t: (t, b, 0)),
                   pl.BlockSpec((1, TB, D), comp_idx)),
        scratch_shapes=[pltpu.VMEM((TB, D), jnp.float32)],                # f32 comp carry
        compiler_params=pltpu.CompilerParams(
            dimension_semantics=("parallel", "arbitrary"),                # keep t arbitrary!
            vmem_limit_bytes=vmem_limit),
    )(rates, x, prev, w1, b1, w2, b2)

    if B_pad != B:
        wager_pad, comp_pad = wager_pad[:, :B], comp_pad[:, :B]
    if not return_all_comps:
        comp_pad = comp_pad[0]
    return wager_pad, comp_pad


def init_params(key, num_linear_units):
    """Matches the PyTorch module's _init_weights(): comparison weight ~ U(-1, 1);
    wager weight ~ U(0, 0.1); biases keep nn.Linear default U(-1/sqrt(fan_in), ...)."""
    D = num_linear_units
    k1, k2, k3, k4 = jax.random.split(key, 4)
    bound = 1.0 / jnp.sqrt(D)
    # PyTorch Linear stores weight as (out, in); we keep it transposed (in, out).
    w1_t = jax.random.uniform(k1, (D, D), jnp.float32, minval=-1.0, maxval=1.0)
    b1 = jax.random.uniform(k2, (D,), jnp.float32, minval=-bound, maxval=bound)
    w2_t = jax.random.uniform(k3, (D, 2), jnp.float32, minval=0.0, maxval=0.1)
    b2 = jax.random.uniform(k4, (2,), jnp.float32, minval=-bound, maxval=bound)
    return (w1_t, b1, w2_t, b2)


if __name__ == "__main__":
    B = 8            # batch
    D = 32           # num_linear_units
    T = 4            # cascade timesteps for the fused kernel demo
    key = jax.random.PRNGKey(0)
    kp, kx, kprev, kseq = jax.random.split(key, 4)

    params = init_params(kp, D)
    prepared = prepare_params(params)
    w1_t, b1, w2_t, b2 = params

    comparison_matrix = jax.random.normal(kx, (B, D), jnp.float32)
    prev_comparison = jax.random.normal(kprev, (B, D), jnp.float32)
    x_seq = jax.random.normal(kseq, (T, B, D), jnp.float32)
    cascade_rate = 0.3

    def q(a):        # bf16 round-trip mirroring what the kernel streams
        return a.astype(jnp.bfloat16).astype(jnp.float32)

    TOL = dict(atol=2e-2, rtol=2e-2)   # loosened for bf16 streams (review note)

    # --- single step, with prev_comparison ---
    wager, comp_out = second_order_forward(comparison_matrix, prev_comparison,
                                           cascade_rate, prepared)
    jax.block_until_ready((wager, comp_out))
    assert wager.shape == (B, 2) and comp_out.shape == (B, D)
    h_ref = jnp.maximum(q(comparison_matrix) @ q(w1_t) + b1, 0.0)
    comp_ref = cascade_rate * h_ref + (1.0 - cascade_rate) * q(prev_comparison)
    wager_ref = comp_ref @ q(w2_t) + b2
    assert jnp.allclose(comp_out, comp_ref, **TOL)
    assert jnp.allclose(wager, wager_ref, **TOL)

    # --- single step, prev_comparison=None path (no prev stream, no rate input) ---
    wager2, comp2 = second_order_forward(comparison_matrix, None, cascade_rate, prepared)
    jax.block_until_ready((wager2, comp2))
    assert jnp.allclose(comp2, h_ref, **TOL)
    assert jnp.allclose(wager2, h_ref @ q(w2_t) + b2, **TOL)

    # --- fused cascade over T timesteps ---
    wagers, comps = second_order_cascade(x_seq, None, cascade_rate, prepared)
    jax.block_until_ready((wagers, comps))
    prev_r = None
    for t in range(T):
        h_t = jnp.maximum(q(x_seq[t]) @ q(w1_t) + b1, 0.0)
        c_t = h_t if prev_r is None else cascade_rate * h_t + (1.0 - cascade_rate) * prev_r
        w_t = c_t @ q(w2_t) + b2
        assert jnp.allclose(comps[t], c_t, **TOL)
        assert jnp.allclose(wagers[t], w_t, **TOL)
        prev_r = c_t

    # --- fused cascade, final comparison state only (skips (T-1)/T of comp writes) ---
    wagers_f, comp_last = second_order_cascade(x_seq, None, cascade_rate, prepared,
                                               return_all_comps=False)
    jax.block_until_ready((wagers_f, comp_last))
    assert jnp.allclose(wagers_f, wagers, atol=1e-5, rtol=1e-5)
    assert jnp.allclose(comp_last, comps[-1], atol=1e-5, rtol=1e-5)

    print("KERNEL_OK")
</pallas_src>

<mosaic_0001>
module attributes {stable_mosaic.version = 11 : i64} {
  func.func @_second_order_kernel_prev(%arg0: i32, %arg1: memref<1x1xf32, #tpu.memory_space<smem>>, %arg2: memref<8x32xbf16, #tpu.memory_space<vmem>>, %arg3: memref<8x32xbf16, #tpu.memory_space<vmem>>, %arg4: memref<32x32xbf16, #tpu.memory_space<vmem>>, %arg5: memref<1x32xf32, #tpu.memory_space<vmem>>, %arg6: memref<32x2xbf16, #tpu.memory_space<vmem>>, %arg7: memref<1x2xf32, #tpu.memory_space<vmem>>, %arg8: memref<8x2xf32, #tpu.memory_space<vmem>>, %arg9: memref<8x32xf32, #tpu.memory_space<vmem>>) attributes {dimension_semantics = [#tpu.dimension_semantics<parallel>], iteration_bounds = array<i64: 1>, scalar_prefetch = 0 : i64, scratch_operands = 0 : i64, tpu.core_type = #tpu.core_type<tc>, window_params = [{transform_indices = @transform_0, window_bounds = array<i64: 1, 1>}, {transform_indices = @transform_1, window_bounds = array<i64: 8, 32>}, {transform_indices = @transform_2, window_bounds = array<i64: 8, 32>}, {pipeline_mode = #tpu.pipeline_mode<synchronous>, transform_indices = @transform_3, window_bounds = array<i64: 32, 32>}, {pipeline_mode = #tpu.pipeline_mode<synchronous>, transform_indices = @transform_4, window_bounds = array<i64: 1, 32>}, {pipeline_mode = #tpu.pipeline_mode<synchronous>, transform_indices = @transform_5, window_bounds = array<i64: 32, 2>}, {pipeline_mode = #tpu.pipeline_mode<synchronous>, transform_indices = @transform_6, window_bounds = array<i64: 1, 2>}, {transform_indices = @transform_7, window_bounds = array<i64: 8, 2>}, {transform_indices = @transform_8, window_bounds = array<i64: 8, 32>}]} {
    %c0 = arith.constant 0 : index
    %c0_0 = arith.constant 0 : index
    %0 = memref.load %arg1[%c0, %c0_0] : memref<1x1xf32, #tpu.memory_space<smem>>
    %c0_1 = arith.constant 0 : index
    %c0_2 = arith.constant 0 : index
    %1 = vector.load %arg2[%c0_1, %c0_2] : memref<8x32xbf16, #tpu.memory_space<vmem>>, vector<8x32xbf16>
    %c0_3 = arith.constant 0 : index
    %c0_4 = arith.constant 0 : index
    %2 = vector.load %arg4[%c0_3, %c0_4] : memref<32x32xbf16, #tpu.memory_space<vmem>>, vector<32x32xbf16>
    %cst = arith.constant dense<0.000000e+00> : vector<8x32xf32>
    %3 = tpu.matmul %1, %2, %cst {dimension_numbers = #tpu.dot_dimension_numbers<[1], [0], [0], [1], [0, 0, 1, 1], [], []>} : vector<8x32xbf16>, vector<32x32xbf16>, vector<8x32xf32> -> vector<8x32xf32>
    %c0_5 = arith.constant 0 : index
    %c0_6 = arith.constant 0 : index
    %4 = vector.load %arg5[%c0_5, %c0_6] : memref<1x32xf32, #tpu.memory_space<vmem>>, vector<1x32xf32>
    %5 = vector.broadcast %4 : vector<1x32xf32> to vector<8x32xf32>
    %6 = arith.addf %3, %5 : vector<8x32xf32>
    %cst_7 = arith.constant 0.000000e+00 : f32
    %7 = vector.broadcast %cst_7 : f32 to vector<8x32xf32>
    %8 = arith.maximumf %6, %7 : vector<8x32xf32>
    %9 = vector.broadcast %0 : f32 to vector<8x32xf32>
    %10 = arith.mulf %9, %8 : vector<8x32xf32>
    %cst_8 = arith.constant 1.000000e+00 : f32
    %11 = arith.subf %cst_8, %0 : f32
    %c0_9 = arith.constant 0 : index
    %c0_10 = arith.constant 0 : index
    %12 = vector.load %arg3[%c0_9, %c0_10] : memref<8x32xbf16, #tpu.memory_space<vmem>>, vector<8x32xbf16>
    %13 = arith.extf %12 : vector<8x32xbf16> to vector<8x32xf32>
    %14 = vector.broadcast %11 : f32 to vector<8x32xf32>
    %15 = arith.mulf %14, %13 : vector<8x32xf32>
    %16 = arith.addf %10, %15 : vector<8x32xf32>
    %c0_11 = arith.constant 0 : index
    %c0_12 = arith.constant 0 : index
    %17 = vector.load %arg9[%c0_11, %c0_12] : memref<8x32xf32, #tpu.memory_space<vmem>>, vector<8x32xf32>
    tpu.vector_store %arg9[%c0_11, %c0_12], %16 {strides = array<i32>} : memref<8x32xf32, #tpu.memory_space<vmem>>, vector<8x32xf32>,
    %c0_13 = arith.constant 0 : index
    %c0_14 = arith.constant 0 : index
    %18 = vector.load %arg6[%c0_13, %c0_14] : memref<32x2xbf16, #tpu.memory_space<vmem>>, vector<32x2xbf16>
    %cst_15 = arith.constant dense<0.000000e+00> : vector<8x2xf32>
    %19 = tpu.matmul %16, %18, %cst_15 {dimension_numbers = #tpu.dot_dimension_numbers<[1], [0], [0], [1], [0, 0, 1, 1], [], []>} : vector<8x32xf32>, vector<32x2xbf16>, vector<8x2xf32> -> vector<8x2xf32>
    %c0_16 = arith.constant 0 : index
    %c0_17 = arith.constant 0 : index
    %20 = vector.load %arg7[%c0_16, %c0_17] : memref<1x2xf32, #tpu.memory_space<vmem>>, vector<1x2xf32>
    %21 = vector.broadcast %20 : vector<1x2xf32> to vector<8x2xf32>
    %22 = arith.addf %19, %21 : vector<8x2xf32>
    %c0_18 = arith.constant 0 : index
    %c0_19 = arith.constant 0 : index
    %23 = vector.load %arg8[%c0_18, %c0_19] : memref<8x2xf32, #tpu.memory_space<vmem>>, vector<8x2xf32>
    tpu.vector_store %arg8[%c0_18, %c0_19], %22 {strides = array<i32>} : memref<8x2xf32, #tpu.memory_space<vmem>>, vector<8x2xf32>,
    return
  }
  func.func @transform_0(%arg0: i32) -> (i32, i32) {
    %c0_i32 = arith.constant 0 : i32
    %c0_i32_0 = arith.constant 0 : i32
    %c0_i32_1 = arith.constant 0 : i32
    return %c0_i32, %c0_i32_0 : i32, i32
  }
  func.func @transform_1(%arg0: i32) -> (i32, i32) {
    %c0_i32 = arith.constant 0 : i32
    %c0_i32_0 = arith.constant 0 : i32
    return %arg0, %c0_i32 : i32, i32
  }
  func.func @transform_2(%arg0: i32) -> (i32, i32) {
    %c0_i32 = arith.constant 0 : i32
    %c0_i32_0 = arith.constant 0 : i32
    return %arg0, %c0_i32 : i32, i32
  }
  func.func @transform_3(%arg0: i32) -> (i32, i32) {
    %c0_i32 = arith.constant 0 : i32
    %c0_i32_0 = arith.constant 0 : i32
    %c0_i32_1 = arith.constant 0 : i32
    return %c0_i32, %c0_i32_0 : i32, i32
  }
  func.func @transform_4(%arg0: i32) -> (i32, i32) {
    %c0_i32 = arith.constant 0 : i32
    %c0_i32_0 = arith.constant 0 : i32
    %c0_i32_1 = arith.constant 0 : i32
    return %c0_i32, %c0_i32_0 : i32, i32
  }
  func.func @transform_5(%arg0: i32) -> (i32, i32) {
    %c0_i32 = arith.constant 0 : i32
    %c0_i32_0 = arith.constant 0 : i32
    %c0_i32_1 = arith.constant 0 : i32
    return %c0_i32, %c0_i32_0 : i32, i32
  }
  func.func @transform_6(%arg0: i32) -> (i32, i32) {
    %c0_i32 = arith.constant 0 : i32
    %c0_i32_0 = arith.constant 0 : i32
    %c0_i32_1 = arith.constant 0 : i32
    return %c0_i32, %c0_i32_0 : i32, i32
  }
  func.func @transform_7(%arg0: i32) -> (i32, i32) {
    %c0_i32 = arith.constant 0 : i32
    %c0_i32_0 = arith.constant 0 : i32
    return %arg0, %c0_i32 : i32, i32
  }
  func.func @transform_8(%arg0: i32) -> (i32, i32) {
    %c0_i32 = arith.constant 0 : i32
    %c0_i32_0 = arith.constant 0 : i32
    return %arg0, %c0_i32 : i32, i32
  }
}

</mosaic_0001>

<llo_original>
// kernel: tpu_custom_call.1
$region0: #{tpu_custom_call.1}
  #allocation0 [shape = 'u32[]', space=smem, size = 0x4, offset = 0x4, fixed_abs, tag = 'smem constant byte address 0x4 - core index']
  #allocation1 [shape = 'u32[144,128]{1,0:T(1,128)}', space=vmem, size = 0x12000, scoped, tag = 'internal scratch']
  #allocation2 [shape = 'f32[1,1]{1,0:T(1,128)S(6)}', space=smem, size = 0x200, scoped, tag = 'scoped memory for tpu_custom_call.1']
  %s0 = inlined_call_operand.<no memory space> [shape: f32[1,1], index: 0, kind: input, shape index: {}]
  %s1 = inlined_call_operand.vmem [shape: bf16[8,32], index: 1, kind: input, shape index: {}]
  %s2 = inlined_call_operand.vmem [shape: bf16[8,32], index: 2, kind: input, shape index: {}]
  %s3 = inlined_call_operand.vmem [shape: bf16[32,32], index: 3, kind: input, shape index: {}]
  %s4 = inlined_call_operand.vmem [shape: f32[1,32], index: 4, kind: input, shape index: {}]
  %s5 = inlined_call_operand.vmem [shape: bf16[32,2], index: 5, kind: input, shape index: {}]
  %s6 = inlined_call_operand.vmem [shape: f32[1,2], index: 6, kind: input, shape index: {}]
  %s7 = inlined_call_operand.vmem [shape: f32[8,2], index: 7, kind: output, shape index: {0}]
  %s8 = inlined_call_operand.hbm [shape: f32[8,32], index: 8, kind: output, shape index: {1}]
  %9 = xla_tuple %s7, %s8
  %s10 = sld [smem:[#allocation0]]
  $region46: #{tpu_custom_call.1} parent=0
    _
  %s12 = ssub.s32 1, %s10
  %s13 = scalar_select 0, %s12, %s10
  %14 = sst [smem:[#allocation2]] %s0
  $region1: #{tpu_custom_call.1} parent=0
    #allocation3 [shape = 'u8[4096]{0}', space=vmem, size = 0x1000, scoped, tag = 'output window, operand 1, single buffered']
    #allocation4 [shape = 's32[1]{0}', space=sflag, size = 0x4, scoped, tag = 'scoped memory for tpu_custom_call.1']
    %15 = vsyncpa [#allocation4], 0
    // Predicated region
    $region2: #{tpu_custom_call.1} parent=1 // pred_check
      _
    $region3: #{tpu_custom_call.1} parent=1 // pred_check_branch
      %17 = sbr.rel (0) target = $region5
    $region4: #{tpu_custom_call.1} parent=1 // pred_region
      _
    $region5: #{tpu_custom_call.1} parent=1 // pred_fallthru
      _
    // Predicated region
    $region6: #{tpu_custom_call.1} parent=1 // pred_check
      _
    $region7: #{tpu_custom_call.1} parent=1 // pred_check_branch
      %19 = sbr.rel (0) target = $region9
    $region8: #{tpu_custom_call.1} parent=1 // pred_region
      _
    $region9: #{tpu_custom_call.1} parent=1 // pred_fallthru
      _
    // Predicated region
    $region10: #{tpu_custom_call.1} parent=1 // pred_check
      _
    $region11: #{tpu_custom_call.1} parent=1 // pred_check_branch
      %21 = sbr.rel (0) target = $region13
    $region12: #{tpu_custom_call.1} parent=1 // pred_region
      _
    $region13: #{tpu_custom_call.1} parent=1 // pred_fallthru
      _
    // Predicated region
    $region14: #{tpu_custom_call.1} parent=1 // pred_check
      _
    $region15: #{tpu_custom_call.1} parent=1 // pred_check_branch
      %23 = sbr.rel (0) target = $region17
    $region16: #{tpu_custom_call.1} parent=1 // pred_region
      _
    $region17: #{tpu_custom_call.1} parent=1 // pred_fallthru
      _
    // Predicated region
    $region18: #{tpu_custom_call.1} parent=1 // pred_check
      _
    $region19: #{tpu_custom_call.1} parent=1 // pred_check_branch
      %25 = sbr.rel (0) target = $region21
    $region20: #{tpu_custom_call.1} parent=1 // pred_region
      _
    $region21: #{tpu_custom_call.1} parent=1 // pred_fallthru
      _
    // Predicated region
    $region22: #{tpu_custom_call.1} parent=1 // pred_check
      _
    $region23: #{tpu_custom_call.1} parent=1 // pred_check_branch
      %27 = sbr.rel (0) target = $region25
    $region24: #{tpu_custom_call.1} parent=1 // pred_region
      _
    $region25: #{tpu_custom_call.1} parent=1 // pred_fallthru
      _
    // Predicated region
    $region26: #{tpu_custom_call.1} parent=1 // pred_check
      _
    $region27: #{tpu_custom_call.1} parent=1 // pred_check_branch
      %29 = sbr.rel (0) target = $region29
    $region28: #{tpu_custom_call.1} parent=1 // pred_region
      _
    $region29: #{tpu_custom_call.1} parent=1 // pred_fallthru
      _
    %s31 = sld [smem:[#allocation2]]
    %v32 = vld [vmem:[%s1] sm:$0xf]
    %v33 = vld [vmem:[%s3] sm:$0xf]
    %v34 = vld [vmem:[%s3 + $0x4] sm:$0xf]
    %v35 = vld [vmem:[%s3 + $0x8] sm:$0xf]
    %v36 = vld [vmem:[%s3 + $0xc] sm:$0xf]
    %v37 = vld [vmem:[%s4] sm:$0x1]
    %v39 = vlaneseq
    %v40 = vshrl.u32 %v39, 7
    %v41 = vsub.s32 0, %v40
    %v42 = vrot.slane %v37, %v41
    %v48 = vunpack.c.l.b16 %v33
    %v49 = vunpack.c.l.b16 %v34
    %v50 = vunpack.c.l.b16 %v35
    %v51 = vunpack.c.l.b16 %v36
    %v52 = vpack.c.b16 %v49, %v48
    %v53 = vpack.c.b16 %v51, %v50
    %vm56 = vcmask 261120
    %v58 = vsel %vm56, %v32, 0
    %60 = vmatprep.subr.bf16.mxu0 0
    %61 = vmatpush1.bf16.msra.mxu0 %v52
    %62 = vmatprep.subr.bf16.mxu0 0
    %63 = vmatpush1.bf16.msra.mxu0 %v53
    %64 = vmatprep.subr.bf16.mxu0 0
    %65 = vmatpush1.bf16.msra.mxu0 0
    %66 = vmatprep.subr.bf16.mxu0 0
    %67 = vmatpush1.bf16.msra.mxu0 0
    %68 = vmatprep.subr.bf16.mxu0 0
    %69 = vmatpush1.bf16.msra.mxu0 0
    %70 = vmatprep.subr.bf16.mxu0 0
    %71 = vmatpush1.bf16.msra.mxu0 0
    %72 = vmatprep.subr.bf16.mxu0 0
    %73 = vmatpush1.bf16.msra.mxu0 0
    %74 = vmatprep.subr.bf16.mxu0 0
    %75 = vmatpush1.bf16.msra.mxu0 0
    %76 = vmatprep.subr.bf16.mxu0 0
    %77 = vmatpush1.bf16.msra.mxu0 0
    %78 = vmatprep.subr.bf16.mxu0 0
    %79 = vmatpush1.bf16.msra.mxu0 0
    %80 = vmatprep.subr.bf16.mxu0 0
    %81 = vmatpush1.bf16.msra.mxu0 0
    %82 = vmatprep.subr.bf16.mxu0 0
    %83 = vmatpush1.bf16.msra.mxu0 0
    %84 = vmatprep.subr.bf16.mxu0 0
    %85 = vmatpush1.bf16.msra.mxu0 0
    %86 = vmatprep.subr.bf16.mxu0 0
    %87 = vmatpush1.bf16.msra.mxu0 0
    %88 = vmatprep.subr.bf16.mxu0 0
    %89 = vmatpush1.bf16.msra.mxu0 0
    %90 = vmatprep.subr.bf16.mxu0 0
    %91 = vmatpush1.bf16.msra.mxu0 0
    %92 = vmatprep.mubr.bf16.mxu0 0
    %93 = vmatmul.mubr.bf16.gmra.mrb[0].mxu0 %v58
    %v94 = vpop.f32.mrb[0].mxu0
    %v95 = vadd.f32 %v42, %v94
    %v96 = vpop.f32.mrb[0].mxu0
    %v97 = vpop.f32.mrb[0].mxu0
    %v98 = vpop.f32.mrb[0].mxu0
    %99 = vdwg.mxu0
    %v100 = vmax.f32 %v95, 0.0
    %v101 = vstv %s31
    %v102 = vmul.f32 %v101, %v100
    %s103 = ssub.f32 1.0, %s31
    %v104 = vld [vmem:[%s2] sm:$0xf]
    %v105 = vunpack.c.l.bf16 %v104
    %v106 = vstv %s103
    %v107 = vmul.f32 %v106, %v105
    %v108 = vadd.f32 %v102, %v107
    %109 = vst.msk [vmem:[#allocation3] sm:$0xff] %vm56, %v108
    %v110 = vld [vmem:[%s5] sm:$0xf]
    %v111 = vld [vmem:[%s5 + $0x4] sm:$0xf]
    %v112 = vld [vmem:[%s5 + $0x8] sm:$0xf]
    %v113 = vld [vmem:[%s5 + $0xc] sm:$0xf]
    %v114 = vld [vmem:[%s6] sm:$0x1]
    %v116 = vlaneseq
    %v117 = vshrl.u32 %v116, 7
    %v118 = vsub.s32 0, %v117
    %v119 = vrot.slane %v114, %v118
    %v125 = vunpack.c.l.b16 %v110
    %v126 = vunpack.c.l.b16 %v111
    %v127 = vunpack.c.l.b16 %v112
    %v128 = vunpack.c.l.b16 %v113
    %v129 = vpack.c.b16 %v126, %v125
    %v130 = vpack.c.b16 %v128, %v127
    %v134 = vsel %vm56, %v108, 0
    %136 = vmatprep.subr.bf16.mxu0 0
    %137 = vmatpush1.bf16.msra.mxu0 %v129
    %138 = vmatprep.subr.bf16.mxu0 0
    %139 = vmatpush1.bf16.msra.mxu0 %v130
    %140 = vmatprep.subr.bf16.mxu0 0
    %141 = vmatpush1.bf16.msra.mxu0 0
    %142 = vmatprep.subr.bf16.mxu0 0
    %143 = vmatpush1.bf16.msra.mxu0 0
    %144 = vmatprep.subr.bf16.mxu0 0
    %145 = vmatpush1.bf16.msra.mxu0 0
    %146 = vmatprep.subr.bf16.mxu0 0
    %147 = vmatpush1.bf16.msra.mxu0 0
    %148 = vmatprep.subr.bf16.mxu0 0
    %149 = vmatpush1.bf16.msra.mxu0 0
    %150 = vmatprep.subr.bf16.mxu0 0
    %151 = vmatpush1.bf16.msra.mxu0 0
    %152 = vmatprep.subr.bf16.mxu0 0
    %153 = vmatpush1.bf16.msra.mxu0 0
    %154 = vmatprep.subr.bf16.mxu0 0
    %155 = vmatpush1.bf16.msra.mxu0 0
    %156 = vmatprep.subr.bf16.mxu0 0
    %157 = vmatpush1.bf16.msra.mxu0 0
    %158 = vmatprep.subr.bf16.mxu0 0
    %159 = vmatpush1.bf16.msra.mxu0 0
    %160 = vmatprep.subr.bf16.mxu0 0
    %161 = vmatpush1.bf16.msra.mxu0 0
    %162 = vmatprep.subr.bf16.mxu0 0
    %163 = vmatpush1.bf16.msra.mxu0 0
    %164 = vmatprep.subr.bf16.mxu0 0
    %165 = vmatpush1.bf16.msra.mxu0 0
    %166 = vmatprep.subr.bf16.mxu0 0
    %167 = vmatpush1.bf16.msra.mxu0 0
    %168 = vmatprep.mubr.f32.mxu0 0.0
    %169 = vmatmul.mubr.f32.gmra.mrb[0].mxu0 %v134
    %v170 = vpop.f32.mrb[0].mxu0
    %v171 = vadd.f32 %v119, %v170
    %v172 = vpop.f32.mrb[0].mxu0
    %173 = vdwg.mxu0
    %vm174 = vcmask 15360
    %175 = vst.msk [vmem:[%s7] sm:$0xff] %vm174, %v171
    // Predicated region
    $region30: #{tpu_custom_call.1} parent=1 // pred_check
      _
    $region31: #{tpu_custom_call.1} parent=1 // pred_check_branch
      %177 = sbr.rel (0) target = $region33
    $region32: #{tpu_custom_call.1} parent=1 // pred_region
      _
    $region33: #{tpu_custom_call.1} parent=1 // pred_fallthru
      _
    // Predicated region
    $region34: #{tpu_custom_call.1} parent=1 // pred_check
      _
    $region35: #{tpu_custom_call.1} parent=1 // pred_check_branch
      %179 = sbr.rel (0) target = $region37
    $region36: #{tpu_custom_call.1} parent=1 // pred_region
      %s181 = ssub.s32 128, 128
      %182 = vsyncadd [#allocation4], %s181
      %s184 = sshll.u32 [#allocation3], 4
      %s185 = int_to_ptr.vmem [resolvable:$true] %s184
      %187 = dma.vmem_to_hbm [thread:$0]  %s185, 128, %s8, [#allocation4]
    $region37: #{tpu_custom_call.1} parent=1 // pred_fallthru
      _
    // Predicated region
    $region38: #{tpu_custom_call.1} parent=1 // pred_check
      _
    $region39: #{tpu_custom_call.1} parent=1 // pred_check_branch
      %189 = sbr.rel (0) target = $region41
    $region40: #{tpu_custom_call.1} parent=1 // pred_region
      _
    $region41: #{tpu_custom_call.1} parent=1 // pred_fallthru
      _
    // Predicated region
    $region42: #{tpu_custom_call.1} parent=1 // pred_check
      _
    $region43: #{tpu_custom_call.1} parent=1 // pred_check_branch
      %191 = sbr.rel (0) target = $region45
    $region44: #{tpu_custom_call.1} parent=1 // pred_region
      %192 = dma.done [#allocation4], 128
    $region45: #{tpu_custom_call.1} parent=1 // pred_fallthru
      _
    %193 = vsyncpa [#allocation4], 1

</llo_original>
